<compile_context>
chip_gen: v7x
topology: tpu7x:2x2x1
jax: 0.10.0
libtpu: 0.0.40
codegen_flags: <defaults>
</compile_context>

<pallas_src>
import functools

import jax
import jax.numpy as jnp
from jax.experimental import pallas as pl
from jax.experimental.pallas import tpu as pltpu

_LOG2E = 1.4426950408889634


# --------------------------------------------------------------------------
# VMEM budgeting helpers
# --------------------------------------------------------------------------
def _vmem_capacity_bytes():
    try:
        info = pltpu.get_tpu_info()
        cap = getattr(info, "vmem_capacity_bytes", None)
        if cap:
            return int(cap)
    except Exception:
        pass
    return 64 * 1024 * 1024  # conservative default (v7x physical per-TC VMEM)


def _vmem_limit(footprint_bytes, cap):
    # footprint + ~35% headroom + a little compiler scratch, floored at 16 MiB,
    # never above ~92% of physical VMEM.
    return int(min(0.92 * cap, max(16 << 20, 1.35 * footprint_bytes + (2 << 20))))


def _qkv_col_tile(d, budget):
    """Column tile over the fused 3D output (multiple of 128, or full width)."""
    full = 3 * d
    if 2 * d * full * 2 <= budget // 2:     # double-buffered bf16 weight fits easily
        return full
    for t in (4096, 2048, 1024, 512, 384, 256, 128):
        if t < full and full % t == 0 and 2 * d * t * 2 <= budget // 2:
            return t
    return full


def _qkv_row_tile(n_rows, d, tn, budget):
    """bf16-aware (>=16 sublanes) row tile; the grid uses cdiv so it need not divide."""
    w_bytes = 2 * d * tn * 2
    rem = max(budget - w_bytes, budget // 4)
    for t in (1024, 512, 256, 128, 64, 32, 16):
        if t <= n_rows and (2 * t * d * 2 + 2 * t * tn * 2 + t * tn * 4) <= rem:
            return t
    return n_rows if n_rows < 16 else 16


def _attn_footprint(tq, tk, d, out_itemsize, kv_bufs):
    return (2 * tq * d * 2                # q double buffer (bf16)
            + 2 * kv_bufs * tk * d * 2    # k + v pipeline buffers (bf16)
            + 2 * tq * d * out_itemsize   # output double buffer
            + tq * d * 4                  # f32 accumulator scratch
            + 2 * tq * 4                  # running max / running sum
            + 12 * tq * tk)               # s / p f32 temporaries


def _attn_tiles(seq_len, d, budget, out_itemsize):
    """Pick (tq, tk): largest q tile first (cuts K/V HBM re-reads), prefer
    256-aligned tiles for the MXU, >=16 rows for bf16 packing, VMEM aware.
    Returns (tq, tk, kv_triple_buffer_ok)."""
    cands = [c for c in (1024, 768, 512, 256, 128, 64, 32, 16) if c <= seq_len]
    if not cands:
        cands = [seq_len]
    for min_tile in (min(256, cands[0]), 0):
        for tq in cands:
            if tq < min_tile:
                continue
            for tk in cands:
                if tk < min_tile:
                    continue
                if _attn_footprint(tq, tk, d, out_itemsize, 2) <= budget:
                    triple = _attn_footprint(tq, tk, d, out_itemsize, 3) <= budget
                    return tq, tk, triple
    t = cands[-1]
    return t, t, False


def _kv_block_spec(block_shape, index_map, n_buffers):
    """K/V BlockSpec, triple-buffered when requested and the API supports it."""
    if n_buffers > 2:
        try:
            return pl.BlockSpec(block_shape, index_map,
                                pipeline_mode=pl.Buffered(n_buffers))
        except (TypeError, AttributeError):
            pass
    return pl.BlockSpec(block_shape, index_map)


# --------------------------------------------------------------------------
# Kernel 1: fused QKV projection over row-collapsed (B*S, D) input.
# --------------------------------------------------------------------------
def _qkv_proj_fused_kernel(x_ref, w_ref, b_ref, qkv_ref):
    # x: (tr, D) bf16, w: (D, tn) bf16, b: (1, tn) f32 -> qkv: (tr, tn) bf16
    acc = jnp.dot(x_ref[...], w_ref[...], preferred_element_type=jnp.float32)
    qkv_ref[...] = (acc + b_ref[...]).astype(qkv_ref.dtype)


def _qkv_proj_split_kernel(x_ref, w_ref, b_ref, q_ref, k_ref, v_ref, *, d):
    # Fallback for D % 128 != 0: three D-wide outputs.
    acc = jnp.dot(x_ref[...], w_ref[...], preferred_element_type=jnp.float32)
    acc = acc + b_ref[...]
    q_ref[...] = acc[:, :d].astype(q_ref.dtype)
    k_ref[...] = acc[:, d:2 * d].astype(k_ref.dtype)
    v_ref[...] = acc[:, 2 * d:].astype(v_ref.dtype)


# --------------------------------------------------------------------------
# Kernel 2: flash attention with online softmax over KV tiles.
#   q already carries the scale * log2(e) factor, so exp2 is exact softmax.
# --------------------------------------------------------------------------
def _flash_attn_kernel(q_ref, k_ref, v_ref, o_ref, m_sc, l_sc, acc_sc,
                       *, tk, seq_len, mask_kv_tail):
    ki = pl.program_id(2)

    @pl.when(ki == 0)
    def _():
        m_sc[...] = jnp.full_like(m_sc, -jnp.inf)
        l_sc[...] = jnp.zeros_like(l_sc)
        acc_sc[...] = jnp.zeros_like(acc_sc)

    q = q_ref[0]          # (tq, D) bf16, scale*log2e already folded in
    k = k_ref[0]          # (tk, D) bf16
    v = v_ref[0]          # (tk, D) bf16

    # Scores q @ k^T via contracting-dim dot_general (no transpose), f32 accum.
    s = jax.lax.dot_general(q, k, (((1,), (1,)), ((), ())),
                            preferred_element_type=jnp.float32)   # (tq, tk)

    if mask_kv_tail:
        col = ki * tk + jax.lax.broadcasted_iota(jnp.int32, s.shape, 1)
        s = jnp.where(col < seq_len, s, -jnp.inf)

    # Online (flash) softmax in base 2 — all statistics in f32.
    m_prev = m_sc[...]
    m_new = jnp.maximum(m_prev, jnp.max(s, axis=-1, keepdims=True))
    alpha = jnp.exp2(m_prev - m_new)
    p = jnp.exp2(s - m_new)                                        # (tq, tk)

    l_sc[...] = alpha * l_sc[...] + jnp.sum(p, axis=-1, keepdims=True)
    acc_sc[...] = alpha * acc_sc[...] + jnp.dot(
        p.astype(v.dtype), v, preferred_element_type=jnp.float32)
    m_sc[...] = m_new

    @pl.when(ki == pl.num_programs(2) - 1)
    def _():
        # Exact reciprocal: once per q tile, negligible cost, tighter accuracy.
        o_ref[0] = (acc_sc[...] * pl.reciprocal(l_sc[...], approx=False)
                    ).astype(o_ref.dtype)


# --------------------------------------------------------------------------
# Host wrapper
# --------------------------------------------------------------------------
def self_attention(x, wq, wk, wv, bq, bk, bv):
    """x: (B, S, D); w*: (D, D) (out, in); b*: (D,). Returns (B, S, D)."""
    B, S, D = x.shape
    out_dtype = x.dtype
    out_itemsize = jnp.dtype(out_dtype).itemsize
    cdt = jnp.bfloat16  # MXU operand dtype; f32 accumulation everywhere

    vmem_cap = _vmem_capacity_bytes()
    budget = int(0.70 * vmem_cap)

    # Fold softmax scale AND the exp->exp2 base change into the Q projection.
    q_fac = (float(D) ** -0.5) * _LOG2E
    w_qkv = jnp.concatenate([wq * q_fac, wk, wv], axis=0).T.astype(cdt)   # (D, 3D)
    b_qkv = jnp.concatenate([bq * q_fac, bk, bv]).reshape(1, 3 * D).astype(jnp.float32)

    fused_out = (D % 128 == 0)   # lane-dense fused (R, 3D) output + col-index split

    # ---------------- Kernel 1: fused QKV projection ----------------
    R = B * S
    x2 = x.reshape(R, D).astype(cdt)
    tn = _qkv_col_tile(D, budget) if fused_out else 3 * D
    tr = _qkv_row_tile(R, D, tn, budget)
    nr = pl.cdiv(R, tr)
    nc = (3 * D) // tn

    fp1 = (2 * tr * D * 2          # x double buffer
           + 2 * D * tn * 2        # weight double buffer
           + 2 * tn * 4 * 2        # bias
           + 2 * tr * tn * 2       # output double buffer(s)
           + tr * tn * 4)          # f32 accumulator temporaries
    proj_cost = pl.CostEstimate(
        flops=2 * R * D * 3 * D,
        transcendentals=0,
        bytes_accessed=int(R * D * 2 + 3 * D * D * 2 + 3 * D * 4 + R * 3 * D * 2))

    if fused_out:
        k1_params = pltpu.CompilerParams(
            dimension_semantics=("parallel", "parallel"),
            vmem_limit_bytes=_vmem_limit(fp1, vmem_cap))
        qkv = pl.pallas_call(
            _qkv_proj_fused_kernel,
            out_shape=jax.ShapeDtypeStruct((R, 3 * D), cdt),
            grid_spec=pltpu.PrefetchScalarGridSpec(
                num_scalar_prefetch=0,
                grid=(nr, nc),
                in_specs=[
                    pl.BlockSpec((tr, D), lambda i, j: (i, 0)),     # x row tile
                    pl.BlockSpec((D, tn), lambda i, j: (0, j)),     # weight col tile
                    pl.BlockSpec((1, tn), lambda i, j: (0, j)),     # bias col tile
                ],
                out_specs=pl.BlockSpec((tr, tn), lambda i, j: (i, j)),
            ),
            compiler_params=k1_params,
            cost_estimate=proj_cost,
        )(x2, w_qkv, b_qkv)
        qkv3 = qkv.reshape(B, S, 3 * D)
        q_in = k_in = v_in = qkv3
        # Split Q/K/V via last-axis block indices 0/1/2 (D is a multiple of 128).
        q_map = lambda b, qi, ki: (b, qi, 0)
        k_map = lambda b, qi, ki: (b, ki, 1)
        v_map = lambda b, qi, ki: (b, ki, 2)
    else:
        k1_params = pltpu.CompilerParams(
            dimension_semantics=("parallel",),
            vmem_limit_bytes=_vmem_limit(fp1, vmem_cap))
        q, k, v = pl.pallas_call(
            functools.partial(_qkv_proj_split_kernel, d=D),
            out_shape=tuple(jax.ShapeDtypeStruct((R, D), cdt) for _ in range(3)),
            grid_spec=pltpu.PrefetchScalarGridSpec(
                num_scalar_prefetch=0,
                grid=(nr,),
                in_specs=[
                    pl.BlockSpec((tr, D), lambda i: (i, 0)),
                    pl.BlockSpec((D, 3 * D), lambda i: (0, 0)),
                    pl.BlockSpec((1, 3 * D), lambda i: (0, 0)),
                ],
                out_specs=tuple(pl.BlockSpec((tr, D), lambda i: (i, 0))
                                for _ in range(3)),
            ),
            compiler_params=k1_params,
            cost_estimate=proj_cost,
        )(x2, w_qkv, b_qkv)
        q_in = q.reshape(B, S, D)
        k_in = k.reshape(B, S, D)
        v_in = v.reshape(B, S, D)
        q_map = lambda b, qi, ki: (b, qi, 0)
        k_map = lambda b, qi, ki: (b, ki, 0)
        v_map = lambda b, qi, ki: (b, ki, 0)

    # ---------------- Kernel 2: flash attention ----------------
    tq, tk, kv_triple = _attn_tiles(S, D, budget, out_itemsize)
    nq = pl.cdiv(S, tq)
    nk = pl.cdiv(S, tk)
    kv_triple = kv_triple and (nk > 2)          # only worth it with a real KV loop
    mask_kv_tail = (S % tk) != 0
    kv_bufs = 3 if kv_triple else 2

    fp2 = _attn_footprint(tq, tk, D, out_itemsize, kv_bufs)
    attn_cost = pl.CostEstimate(
        flops=4 * B * S * S * D,
        transcendentals=B * S * S,
        bytes_accessed=int(3 * B * S * D * 2 + B * S * D * out_itemsize))

    out = pl.pallas_call(
        functools.partial(_flash_attn_kernel, tk=tk, seq_len=S,
                          mask_kv_tail=mask_kv_tail),
        out_shape=jax.ShapeDtypeStruct((B, S, D), out_dtype),
        grid_spec=pltpu.PrefetchScalarGridSpec(
            num_scalar_prefetch=0,
            grid=(B, nq, nk),
            in_specs=[
                pl.BlockSpec((1, tq, D), q_map),               # q
                _kv_block_spec((1, tk, D), k_map, kv_bufs),    # k
                _kv_block_spec((1, tk, D), v_map, kv_bufs),    # v
            ],
            out_specs=pl.BlockSpec((1, tq, D), lambda b, qi, ki: (b, qi, 0)),
            scratch_shapes=[
                pltpu.VMEM((tq, 1), jnp.float32),   # running max
                pltpu.VMEM((tq, 1), jnp.float32),   # running sum
                pltpu.VMEM((tq, D), jnp.float32),   # f32 output accumulator
            ],
        ),
        compiler_params=pltpu.CompilerParams(
            dimension_semantics=("parallel", "parallel", "arbitrary"),
            vmem_limit_bytes=_vmem_limit(fp2, vmem_cap)),
        cost_estimate=attn_cost,
    )(q_in, k_in, v_in)

    return out


# --------------------------------------------------------------------------
# Pure-JAX reference (f32)
# --------------------------------------------------------------------------
def _reference(x, wq, wk, wv, bq, bk, bv):
    D = x.shape[-1]
    scale = float(D) ** (-0.5)
    q = jnp.einsum("bsd,ed->bse", x, wq) + bq
    k = jnp.einsum("bsd,ed->bse", x, wk) + bk
    v = jnp.einsum("bsd,ed->bse", x, wv) + bv
    attn = jnp.einsum("bqd,bkd->bqk", q, k) * scale
    attn = jax.nn.softmax(attn, axis=-1)
    return jnp.einsum("bqk,bkd->bqd", attn, v)


if __name__ == "__main__":
    B, S, D = 2, 8, 32  # batch, seq, dim

    key = jax.random.PRNGKey(0)
    kx, kq, kk, kv, kbq, kbk, kbv = jax.random.split(key, 7)

    x = jax.random.normal(kx, (B, S, D), dtype=jnp.float32)
    # Deterministic "Linear(dim, dim)" parameters (weight: (out, in), bias: (out,)).
    bound = 1.0 / (D ** 0.5)
    wq = jax.random.uniform(kq, (D, D), jnp.float32, -bound, bound)
    wk = jax.random.uniform(kk, (D, D), jnp.float32, -bound, bound)
    wv = jax.random.uniform(kv, (D, D), jnp.float32, -bound, bound)
    bq = jax.random.uniform(kbq, (D,), jnp.float32, -bound, bound)
    bk = jax.random.uniform(kbk, (D,), jnp.float32, -bound, bound)
    bv = jax.random.uniform(kbv, (D,), jnp.float32, -bound, bound)

    out = self_attention(x, wq, wk, wv, bq, bk, bv)
    out = jax.block_until_ready(out)

    ref = _reference(x, wq, wk, wv, bq, bk, bv)
    assert out.shape == (B, S, D)
    # bf16 MXU operands (q/k/v round-trip in bf16) => looser tolerance than f32.
    assert jnp.allclose(out, ref, atol=2.5e-2, rtol=2.5e-2), "mismatch vs reference"

    print("KERNEL_OK")
</pallas_src>

<mosaic_0001>
module attributes {stable_mosaic.version = 11 : i64} {
  func.func @_qkv_proj_split_kernel(%arg0: i32, %arg1: memref<16x32xbf16, #tpu.memory_space<vmem>>, %arg2: memref<32x96xbf16, #tpu.memory_space<vmem>>, %arg3: memref<1x96xf32, #tpu.memory_space<vmem>>, %arg4: memref<16x32xbf16, #tpu.memory_space<vmem>>, %arg5: memref<16x32xbf16, #tpu.memory_space<vmem>>, %arg6: memref<16x32xbf16, #tpu.memory_space<vmem>>) attributes {dimension_semantics = [#tpu.dimension_semantics<parallel>], iteration_bounds = array<i64: 1>, scalar_prefetch = 0 : i64, scratch_operands = 0 : i64, tpu.core_type = #tpu.core_type<tc>, window_params = [{transform_indices = @transform_0, window_bounds = array<i64: 16, 32>}, {pipeline_mode = #tpu.pipeline_mode<synchronous>, transform_indices = @transform_1, window_bounds = array<i64: 32, 96>}, {pipeline_mode = #tpu.pipeline_mode<synchronous>, transform_indices = @transform_2, window_bounds = array<i64: 1, 96>}, {transform_indices = @transform_3, window_bounds = array<i64: 16, 32>}, {transform_indices = @transform_4, window_bounds = array<i64: 16, 32>}, {transform_indices = @transform_5, window_bounds = array<i64: 16, 32>}]} {
    %c0 = arith.constant 0 : index
    %c0_0 = arith.constant 0 : index
    %0 = vector.load %arg1[%c0, %c0_0] : memref<16x32xbf16, #tpu.memory_space<vmem>>, vector<16x32xbf16>
    %c0_1 = arith.constant 0 : index
    %c0_2 = arith.constant 0 : index
    %1 = vector.load %arg2[%c0_1, %c0_2] : memref<32x96xbf16, #tpu.memory_space<vmem>>, vector<32x96xbf16>
    %cst = arith.constant dense<0.000000e+00> : vector<16x96xf32>
    %2 = tpu.matmul %0, %1, %cst {dimension_numbers = #tpu.dot_dimension_numbers<[1], [0], [0], [1], [0, 0, 1, 1], [], []>} : vector<16x32xbf16>, vector<32x96xbf16>, vector<16x96xf32> -> vector<16x96xf32>
    %c0_3 = arith.constant 0 : index
    %c0_4 = arith.constant 0 : index
    %3 = vector.load %arg3[%c0_3, %c0_4] : memref<1x96xf32, #tpu.memory_space<vmem>>, vector<1x96xf32>
    %4 = vector.broadcast %3 : vector<1x96xf32> to vector<16x96xf32>
    %5 = arith.addf %2, %4 : vector<16x96xf32>
    %6 = vector.extract_strided_slice %5 {offsets = [0, 0], sizes = [16, 32], strides = [1, 1]} : vector<16x96xf32> to vector<16x32xf32>
    %7 = arith.truncf %6 : vector<16x32xf32> to vector<16x32xbf16>
    %c0_5 = arith.constant 0 : index
    %c0_6 = arith.constant 0 : index
    %8 = vector.load %arg4[%c0_5, %c0_6] : memref<16x32xbf16, #tpu.memory_space<vmem>>, vector<16x32xbf16>
    tpu.vector_store %arg4[%c0_5, %c0_6], %7 {strides = array<i32>} : memref<16x32xbf16, #tpu.memory_space<vmem>>, vector<16x32xbf16>,
    %9 = vector.extract_strided_slice %5 {offsets = [0, 32], sizes = [16, 32], strides = [1, 1]} : vector<16x96xf32> to vector<16x32xf32>
    %10 = arith.truncf %9 : vector<16x32xf32> to vector<16x32xbf16>
    %c0_7 = arith.constant 0 : index
    %c0_8 = arith.constant 0 : index
    %11 = vector.load %arg5[%c0_7, %c0_8] : memref<16x32xbf16, #tpu.memory_space<vmem>>, vector<16x32xbf16>
    tpu.vector_store %arg5[%c0_7, %c0_8], %10 {strides = array<i32>} : memref<16x32xbf16, #tpu.memory_space<vmem>>, vector<16x32xbf16>,
    %12 = vector.extract_strided_slice %5 {offsets = [0, 64], sizes = [16, 32], strides = [1, 1]} : vector<16x96xf32> to vector<16x32xf32>
    %13 = arith.truncf %12 : vector<16x32xf32> to vector<16x32xbf16>
    %c0_9 = arith.constant 0 : index
    %c0_10 = arith.constant 0 : index
    %14 = vector.load %arg6[%c0_9, %c0_10] : memref<16x32xbf16, #tpu.memory_space<vmem>>, vector<16x32xbf16>
    tpu.vector_store %arg6[%c0_9, %c0_10], %13 {strides = array<i32>} : memref<16x32xbf16, #tpu.memory_space<vmem>>, vector<16x32xbf16>,
    return
  }
  func.func @transform_0(%arg0: i32) -> (i32, i32) {
    %c0_i32 = arith.constant 0 : i32
    %c0_i32_0 = arith.constant 0 : i32
    return %arg0, %c0_i32 : i32, i32
  }
  func.func @transform_1(%arg0: i32) -> (i32, i32) {
    %c0_i32 = arith.constant 0 : i32
    %c0_i32_0 = arith.constant 0 : i32
    %c0_i32_1 = arith.constant 0 : i32
    return %c0_i32, %c0_i32_0 : i32, i32
  }
  func.func @transform_2(%arg0: i32) -> (i32, i32) {
    %c0_i32 = arith.constant 0 : i32
    %c0_i32_0 = arith.constant 0 : i32
    %c0_i32_1 = arith.constant 0 : i32
    return %c0_i32, %c0_i32_0 : i32, i32
  }
  func.func @transform_3(%arg0: i32) -> (i32, i32) {
    %c0_i32 = arith.constant 0 : i32
    %c0_i32_0 = arith.constant 0 : i32
    return %arg0, %c0_i32 : i32, i32
  }
  func.func @transform_4(%arg0: i32) -> (i32, i32) {
    %c0_i32 = arith.constant 0 : i32
    %c0_i32_0 = arith.constant 0 : i32
    return %arg0, %c0_i32 : i32, i32
  }
  func.func @transform_5(%arg0: i32) -> (i32, i32) {
    %c0_i32 = arith.constant 0 : i32
    %c0_i32_0 = arith.constant 0 : i32
    return %arg0, %c0_i32 : i32, i32
  }
}

</mosaic_0001>

<llo_original>
// kernel: tpu_custom_call.1
$region0: #{tpu_custom_call.1}
  #allocation0 [shape = 'u32[]', space=smem, size = 0x4, offset = 0x4, fixed_abs, tag = 'smem constant byte address 0x4 - core index']
  #allocation1 [shape = 'u32[144,128]{1,0:T(1,128)}', space=vmem, size = 0x12000, scoped, tag = 'internal scratch']
  %s0 = inlined_call_operand.hbm [shape: bf16[16,32], index: 0, kind: input, shape index: {}]
  %s1 = inlined_call_operand.hbm [shape: bf16[32,96], index: 1, kind: input, shape index: {}]
  %s2 = inlined_call_operand.vmem [shape: f32[1,96], index: 2, kind: input, shape index: {}]
  %s3 = inlined_call_operand.hbm [shape: bf16[16,32], index: 3, kind: output, shape index: {0}]
  %s4 = inlined_call_operand.hbm [shape: bf16[16,32], index: 4, kind: output, shape index: {1}]
  %s5 = inlined_call_operand.hbm [shape: bf16[16,32], index: 5, kind: output, shape index: {2}]
  %6 = xla_tuple %s3, %s4, %s5
  %s7 = sld [smem:[#allocation0]]
  $region46: #{tpu_custom_call.1} parent=0
    _
  %s9 = ssub.s32 1, %s7
  %s10 = scalar_select 0, %s9, %s7
  $region1: #{tpu_custom_call.1} parent=0
    #allocation2 [shape = 'u8[4096]{0}', space=vmem, size = 0x1000, scoped, tag = 'input window, operand 0, single buffered']
    #allocation3 [shape = 's32[1]{0}', space=sflag, size = 0x4, scoped, tag = 'scoped memory for tpu_custom_call.1']
    #allocation4 [shape = 's32[1]{0}', space=sflag, size = 0x4, scoped, tag = 'scoped memory for tpu_custom_call.1']
    #allocation5 [shape = 'u8[8192]{0}', space=vmem, size = 0x2000, scoped, tag = 'input window, operand 1, single buffered']
    #allocation6 [shape = 's32[1]{0}', space=sflag, size = 0x4, scoped, tag = 'scoped memory for tpu_custom_call.1']
    #allocation7 [shape = 'u8[4096]{0}', space=vmem, size = 0x1000, scoped, tag = 'output window, operand 0, single buffered']
    #allocation8 [shape = 'u8[4096]{0}', space=vmem, size = 0x1000, scoped, tag = 'output window, operand 1, single buffered']
    #allocation9 [shape = 's32[1]{0}', space=sflag, size = 0x4, scoped, tag = 'scoped memory for tpu_custom_call.1']
    #allocation10 [shape = 'u8[4096]{0}', space=vmem, size = 0x1000, scoped, tag = 'output window, operand 2, single buffered']
    %11 = vsyncpa [#allocation3], 0
    %12 = vsyncpa [#allocation6], 0
    %13 = vsyncpa [#allocation4], 0
    %14 = vsyncpa [#allocation9], 0
    // Predicated region
    $region2: #{tpu_custom_call.1} parent=1 // pred_check
      _
    $region3: #{tpu_custom_call.1} parent=1 // pred_check_branch
      %16 = sbr.rel (0) target = $region5
    $region4: #{tpu_custom_call.1} parent=1 // pred_region
      %s18 = ssub.s32 128, 128
      %19 = vsyncadd [#allocation3], %s18
      %s20 = sshll.u32 [#allocation2], 4
      %s21 = int_to_ptr.vmem [resolvable:$true] %s20
      %26 = dma.hbm_to_vmem [thread:$0]  %s0, 128, %s21, [#allocation3], 64, 64, 4
    $region5: #{tpu_custom_call.1} parent=1 // pred_fallthru
      _
    // Predicated region
    $region6: #{tpu_custom_call.1} parent=1 // pred_check
      _
    $region7: #{tpu_custom_call.1} parent=1 // pred_check_branch
      %28 = sbr.rel (0) target = $region9
    $region8: #{tpu_custom_call.1} parent=1 // pred_region
      %s30 = ssub.s32 256, 256
      %31 = vsyncadd [#allocation6], %s30
      %s32 = sshll.u32 [#allocation5], 4
      %s33 = int_to_ptr.vmem [resolvable:$true] %s32
      %38 = dma.hbm_to_vmem [thread:$0]  %s1, 256, %s33, [#allocation6], 64, 64, 4
    $region9: #{tpu_custom_call.1} parent=1 // pred_fallthru
      _
    // Predicated region
    $region10: #{tpu_custom_call.1} parent=1 // pred_check
      _
    $region11: #{tpu_custom_call.1} parent=1 // pred_check_branch
      %40 = sbr.rel (0) target = $region13
    $region12: #{tpu_custom_call.1} parent=1 // pred_region
      _
    $region13: #{tpu_custom_call.1} parent=1 // pred_fallthru
      _
    // Predicated region
    $region14: #{tpu_custom_call.1} parent=1 // pred_check
      _
    $region15: #{tpu_custom_call.1} parent=1 // pred_check_branch
      %42 = sbr.rel (0) target = $region17
    $region16: #{tpu_custom_call.1} parent=1 // pred_region
      %43 = dma.done [#allocation3], 128
    $region17: #{tpu_custom_call.1} parent=1 // pred_fallthru
      _
    // Predicated region
    $region18: #{tpu_custom_call.1} parent=1 // pred_check
      _
    $region19: #{tpu_custom_call.1} parent=1 // pred_check_branch
      %45 = sbr.rel (0) target = $region21
    $region20: #{tpu_custom_call.1} parent=1 // pred_region
      %46 = dma.done [#allocation6], 256
    $region21: #{tpu_custom_call.1} parent=1 // pred_fallthru
      _
    %v48 = vld [vmem:[#allocation2] sm:$0xf]
    %v49 = vld [vmem:[#allocation2 + $0x4] sm:$0xf]
    %v50 = vld [vmem:[#allocation5] sm:$0xf]
    %v51 = vld [vmem:[#allocation5 + $0x4] sm:$0xf]
    %v52 = vld [vmem:[#allocation5 + $0x8] sm:$0xf]
    %v53 = vld [vmem:[#allocation5 + $0xc] sm:$0xf]
    %v54 = vld [vmem:[%s2] sm:$0x1]
    %v56 = vlaneseq
    %v57 = vshrl.u32 %v56, 7
    %v58 = vsub.s32 0, %v57
    %v59 = vrot.slane %v54, %v58
    %v63 = vunpack.c.l.b16 %v48
    %v64 = vunpack.c.l.b16 %v49
    %v65 = vpack.c.b16 %v64, %v63
    %v70 = vunpack.c.l.b16 %v50
    %v71 = vunpack.c.l.b16 %v51
    %v72 = vunpack.c.l.b16 %v52
    %v73 = vunpack.c.l.b16 %v53
    %v74 = vpack.c.b16 %v71, %v70
    %v75 = vpack.c.b16 %v73, %v72
    %vm78 = vcmask 261120
    %v80 = vsel %vm78, %v65, 0
    %82 = vmatprep.subr.bf16.mxu0 0
    %83 = vmatpush1.bf16.msra.mxu0 %v74
    %84 = vmatprep.subr.bf16.mxu0 0
    %85 = vmatpush1.bf16.msra.mxu0 %v75
    %86 = vmatprep.subr.bf16.mxu0 0
    %87 = vmatpush1.bf16.msra.mxu0 0
    %88 = vmatprep.subr.bf16.mxu0 0
    %89 = vmatpush1.bf16.msra.mxu0 0
    %90 = vmatprep.subr.bf16.mxu0 0
    %91 = vmatpush1.bf16.msra.mxu0 0
    %92 = vmatprep.subr.bf16.mxu0 0
    %93 = vmatpush1.bf16.msra.mxu0 0
    %94 = vmatprep.subr.bf16.mxu0 0
    %95 = vmatpush1.bf16.msra.mxu0 0
    %96 = vmatprep.subr.bf16.mxu0 0
    %97 = vmatpush1.bf16.msra.mxu0 0
    %98 = vmatprep.subr.bf16.mxu0 0
    %99 = vmatpush1.bf16.msra.mxu0 0
    %100 = vmatprep.subr.bf16.mxu0 0
    %101 = vmatpush1.bf16.msra.mxu0 0
    %102 = vmatprep.subr.bf16.mxu0 0
    %103 = vmatpush1.bf16.msra.mxu0 0
    %104 = vmatprep.subr.bf16.mxu0 0
    %105 = vmatpush1.bf16.msra.mxu0 0
    %106 = vmatprep.subr.bf16.mxu0 0
    %107 = vmatpush1.bf16.msra.mxu0 0
    %108 = vmatprep.subr.bf16.mxu0 0
    %109 = vmatpush1.bf16.msra.mxu0 0
    %110 = vmatprep.subr.bf16.mxu0 0
    %111 = vmatpush1.bf16.msra.mxu0 0
    %112 = vmatprep.subr.bf16.mxu0 0
    %113 = vmatpush1.bf16.msra.mxu0 0
    %114 = vmatprep.mubr.bf16.mxu0 0
    %115 = vmatmul.mubr.bf16.gmra.mrb[0].mxu0 %v80
    %v116 = vpop.f32.mrb[0].mxu0
    %v117 = vadd.f32 %v59, %v116
    %v118 = vpop.f32.mrb[0].mxu0
    %v119 = vpop.f32.mrb[0].mxu0
    %v120 = vadd.f32 %v59, %v119
    %v121 = vpop.f32.mrb[0].mxu0
    %122 = vdwg.mxu0
    %v123 = vpack.c.bf16 %v120, %v117
    %v125 = vunpack.c.l.b16 %v123
    %v126 = vunpack.c.h.b16 %v123
    %v127 = vpack.c.b16 %v125, %v125
    %v128 = vpack.c.b16 %v126, %v126
    %vm131 = vcmask 257024
    %132 = vst.msk [vmem:[#allocation7] sm:$0xf] %vm131, %v127
    %133 = vst.msk [vmem:[#allocation7 + $0x4] sm:$0xf] %vm131, %v128
    %134 = vrot.lane.b32.xlu0 %v127, 96
    %v135 = vpop.permute.xlu0 %134
    %136 = vrot.lane.b32.xlu0 %v128, 96
    %v137 = vpop.permute.xlu0 %136
    %140 = vst.msk [vmem:[#allocation8] sm:$0xf] %vm131, %v135
    %141 = vst.msk [vmem:[#allocation8 + $0x4] sm:$0xf] %vm131, %v137
    %142 = vrot.lane.b32.xlu0 %v127, 64
    %v143 = vpop.permute.xlu0 %142
    %144 = vrot.lane.b32.xlu0 %v128, 64
    %v145 = vpop.permute.xlu0 %144
    %148 = vst.msk [vmem:[#allocation10] sm:$0xf] %vm131, %v143
    %149 = vst.msk [vmem:[#allocation10 + $0x4] sm:$0xf] %vm131, %v145
    // Predicated region
    $region22: #{tpu_custom_call.1} parent=1 // pred_check
      _
    $region23: #{tpu_custom_call.1} parent=1 // pred_check_branch
      %151 = sbr.rel (0) target = $region25
    $region24: #{tpu_custom_call.1} parent=1 // pred_region
      %s153 = ssub.s32 128, 128
      %154 = vsyncadd [#allocation4], %s153
      %s155 = sshll.u32 [#allocation7], 4
      %s156 = int_to_ptr.vmem [resolvable:$true] %s155
      %161 = dma.vmem_to_hbm [thread:$0]  %s156, 128, %s3, [#allocation4], 64, 64, 4
    $region25: #{tpu_custom_call.1} parent=1 // pred_fallthru
      _
    // Predicated region
    $region26: #{tpu_custom_call.1} parent=1 // pred_check
      _
    $region27: #{tpu_custom_call.1} parent=1 // pred_check_branch
      %163 = sbr.rel (0) target = $region29
    $region28: #{tpu_custom_call.1} parent=1 // pred_region
      %s165 = ssub.s32 128, 128
      %166 = vsyncadd [#allocation9], %s165
      %s167 = sshll.u32 [#allocation8], 4
      %s168 = int_to_ptr.vmem [resolvable:$true] %s167
      %173 = dma.vmem_to_hbm [thread:$0]  %s168, 128, %s4, [#allocation9], 64, 64, 4
    $region29: #{tpu_custom_call.1} parent=1 // pred_fallthru
      _
    // Predicated region
    $region30: #{tpu_custom_call.1} parent=1 // pred_check
      _
    $region31: #{tpu_custom_call.1} parent=1 // pred_check_branch
      %175 = sbr.rel (0) target = $region33
    $region32: #{tpu_custom_call.1} parent=1 // pred_region
      %s177 = ssub.s32 128, 128
      %178 = vsyncadd [#allocation9], %s177
      %s179 = sshll.u32 [#allocation10], 4
      %s180 = int_to_ptr.vmem [resolvable:$true] %s179
      %185 = dma.vmem_to_hbm [thread:$0]  %s180, 128, %s5, [#allocation9], 64, 64, 4
    $region33: #{tpu_custom_call.1} parent=1 // pred_fallthru
      _
    // Predicated region
    $region34: #{tpu_custom_call.1} parent=1 // pred_check
      _
    $region35: #{tpu_custom_call.1} parent=1 // pred_check_branch
      %187 = sbr.rel (0) target = $region37
    $region36: #{tpu_custom_call.1} parent=1 // pred_region
      %188 = dma.done [#allocation4], 128
    $region37: #{tpu_custom_call.1} parent=1 // pred_fallthru
      _
    // Predicated region
    $region38: #{tpu_custom_call.1} parent=1 // pred_check
      _
    $region39: #{tpu_custom_call.1} parent=1 // pred_check_branch
      %190 = sbr.rel (0) target = $region41
    $region40: #{tpu_custom_call.1} parent=1 // pred_region
      %191 = dma.done [#allocation9], 128
    $region41: #{tpu_custom_call.1} parent=1 // pred_fallthru
      _
    // Predicated region
    $region42: #{tpu_custom_call.1} parent=1 // pred_check
      _
    $region43: #{tpu_custom_call.1} parent=1 // pred_check_branch
      %193 = sbr.rel (0) target = $region45
    $region44: #{tpu_custom_call.1} parent=1 // pred_region
      %194 = dma.done [#allocation9], 128
    $region45: #{tpu_custom_call.1} parent=1 // pred_fallthru
      _
    %195 = vsyncpa [#allocation3], 1
    %196 = vsyncpa [#allocation6], 1
    %197 = vsyncpa [#allocation4], 1
    %198 = vsyncpa [#allocation9], 1

</llo_original>
